<compile_context>
chip_gen: v7x
topology: tpu7x:2x2x1
jax: 0.10.0
libtpu: 0.0.40
codegen_flags: <defaults>
</compile_context>

<pallas_src>
import functools

import jax
import jax.numpy as jnp
from jax import lax
from jax.experimental import pallas as pl
from jax.experimental.pallas import tpu as pltpu

_EPS = 1e-8  # matches torch.nn.functional.cosine_similarity default eps


def _cl_tile_kernel(x_ref, y_ref, col_ref, row_ref, diag_ref, *, inv_tau: float):
    """Processes one (i, j) tile of the bs x bs similarity matrix.

    x_ref   : (t, d)    rows i*t:(i+1)*t of X (MXU dtype, e.g. bf16)
    y_ref   : (t, d)    rows j*t:(j+1)*t of Y
    col_ref : (1, 1, t) partial column sums of exp((sim-1)/tau) for this tile
    row_ref : (t, 1)    row sums of exp((sim-1)/tau), accumulated over j
    diag_ref: (t, 1)    cos(X_k, Y_k) for rows of block i (written when j == i)
    """
    i = pl.program_id(0)
    j = pl.program_id(1)

    x = x_ref[...]                                   # (t, d) mxu dtype
    y = y_ref[...]                                   # (t, d)
    xf = x.astype(jnp.float32)
    yf = y.astype(jnp.float32)

    eps2 = jnp.float32(_EPS * _EPS)
    inv_nx = lax.rsqrt(jnp.maximum(jnp.sum(xf * xf, axis=1, keepdims=True), eps2))
    inv_ny = lax.rsqrt(jnp.maximum(jnp.sum(yf * yf, axis=1, keepdims=True), eps2))

    # Pre-normalize Y rows (broadcast along lanes, no relayout), keep the MXU
    # operands in the input (bf16) dtype, accumulate in f32.
    yn = yf * inv_ny                                                  # (t, d) f32
    raw = lax.dot_general(
        x, yn.astype(x.dtype),
        dimension_numbers=(((1,), (1,)), ((), ())),
        preferred_element_type=jnp.float32)                           # (t, t) f32
    sim = raw * inv_nx                                                # cosine tile

    # exp((sim - 1) / tau); the common exp(-1/tau) factor cancels in the loss.
    if inv_tau == 1.0:
        z = sim - 1.0
    else:
        z = sim * inv_tau - inv_tau
    e = jnp.exp(z)                                                    # (t, t) f32

    # Column sums of this tile -> streamed out per (i, j), summed over i later.
    col_ref[...] = jnp.sum(e, axis=0, keepdims=True).reshape(col_ref.shape)

    # Row sums accumulate across the j (inner, "arbitrary") grid axis.
    @pl.when(j == 0)
    def _init_rows():
        row_ref[...] = jnp.zeros_like(row_ref)

    row_ref[...] += jnp.sum(e, axis=1, keepdims=True)

    # Diagonal (matched pairs) only lives in blocks with i == j.
    @pl.when(i == j)
    def _diag():
        diag_ref[...] = jnp.sum(xf * yn, axis=1, keepdims=True) * inv_nx


def contrastive_loss(X, Y, tau: float = 1.0, *, mxu_dtype=jnp.bfloat16,
                     block=None):
    """Equivalent of Contrastive_Loss(tau=tau, project=False).forward(X, Y).

    X, Y: (bs, hidden). Returns (bs, 1) float32 per-sample symmetric loss.
    """
    assert X.shape == Y.shape and X.ndim == 2
    bs, d = X.shape
    inv_tau = 1.0 / float(tau)

    if block is None:
        block = 128 if (bs % 128 == 0) else bs
    assert bs % block == 0, "batch must be divisible by the tile size"
    nblk = bs // block

    Xc = X.astype(mxu_dtype)
    Yc = Y.astype(mxu_dtype)

    kernel = functools.partial(_cl_tile_kernel, inv_tau=inv_tau)

    col_part, row_sum, diag = pl.pallas_call(
        kernel,
        grid=(nblk, nblk),
        in_specs=[
            pl.BlockSpec((block, d), lambda i, j: (i, 0)),   # X row block
            pl.BlockSpec((block, d), lambda i, j: (j, 0)),   # Y col block
        ],
        out_specs=[
            pl.BlockSpec((1, 1, block), lambda i, j: (i, 0, j)),  # partial col sums
            pl.BlockSpec((block, 1), lambda i, j: (i, 0)),        # row sums
            pl.BlockSpec((block, 1), lambda i, j: (i, 0)),        # diag cosine
        ],
        out_shape=[
            jax.ShapeDtypeStruct((nblk, 1, bs), jnp.float32),
            jax.ShapeDtypeStruct((bs, 1), jnp.float32),
            jax.ShapeDtypeStruct((bs, 1), jnp.float32),
        ],
        compiler_params=pltpu.CompilerParams(
            dimension_semantics=("parallel", "arbitrary"),
            vmem_limit_bytes=48 * 1024 * 1024,
        ),
    )(Xc, Yc)

    # O(bs) epilogue: combine the reductions into the symmetric InfoNCE loss.
    col_sum = jnp.sum(col_part, axis=0).reshape(bs)   # sum_i exp((sim[i,j]-1)/tau)
    row_sum = row_sum.reshape(bs)                     # sum_j exp((sim[i,j]-1)/tau)
    dsim = diag.reshape(bs)                           # cos(X_k, Y_k)

    log_pos = dsim * inv_tau - inv_tau if inv_tau != 1.0 else dsim - 1.0
    pos = jnp.exp(log_pos)
    neg_xy = col_sum - pos                            # compute_cl(X, Y) denominator
    neg_yx = row_sum - pos                            # compute_cl(Y, X) denominator
    loss = -(2.0 * log_pos - jnp.log(neg_xy) - jnp.log(neg_yx))
    return loss.reshape(bs, 1)

    # TODO(synk): project=True path (two nn.Linear projectors) is plain-JAX glue
    #             and is omitted since the default constructor does not create it.


def _reference(X, Y, tau=1.0):
    # Pure-JAX f32 reference of the PyTorch forward (project=False).
    eps = 1e-8
    xn = jnp.maximum(jnp.linalg.norm(X, axis=1, keepdims=True), eps)
    yn = jnp.maximum(jnp.linalg.norm(Y, axis=1, keepdims=True), eps)
    sim = (X / xn) @ (Y / yn).T

    def compute_cl(s):
        pos = jnp.exp(jnp.diag(s) / tau)[None, :]
        neg = jnp.sum(jnp.exp(s / tau), axis=0)[None, :] - pos
        return -jnp.log(pos / neg).reshape(s.shape[0], 1)

    return compute_cl(sim) + compute_cl(sim.T)


if __name__ == "__main__":
    # Case 1: small single-tile problem (bs=8, hidden=32).
    kx, ky = jax.random.split(jax.random.PRNGKey(0))
    bs, hidden = 8, 32
    X = jax.random.normal(kx, (bs, hidden), dtype=jnp.float32)
    Y = jax.random.normal(ky, (bs, hidden), dtype=jnp.float32)

    out = jax.block_until_ready(contrastive_loss(X, Y, tau=1.0))
    ref = _reference(X, Y, tau=1.0)
    assert out.shape == (bs, 1)
    assert jnp.allclose(out, ref, atol=3e-2, rtol=3e-2), \
        f"max abs err {float(jnp.max(jnp.abs(out - ref)))}"

    # Case 2: multi-tile grid (2x2 tiles of 128) — exercises the accumulators,
    # the diagonal-block gating and the partial column-sum reduction.
    kx2, ky2 = jax.random.split(jax.random.PRNGKey(1))
    bs2, hidden2 = 256, 128
    X2 = jax.random.normal(kx2, (bs2, hidden2), dtype=jnp.float32)
    Y2 = jax.random.normal(ky2, (bs2, hidden2), dtype=jnp.float32)

    out2 = jax.block_until_ready(contrastive_loss(X2, Y2, tau=1.0))
    ref2 = _reference(X2, Y2, tau=1.0)
    assert out2.shape == (bs2, 1)
    assert jnp.allclose(out2, ref2, atol=3e-2, rtol=3e-2), \
        f"max abs err {float(jnp.max(jnp.abs(out2 - ref2)))}"

    print("KERNEL_OK")
</pallas_src>

<mosaic_0001>
module attributes {stable_mosaic.version = 11 : i64} {
  func.func @_cl_tile_kernel(%arg0: i32, %arg1: i32, %arg2: memref<8x32xbf16, #tpu.memory_space<vmem>>, %arg3: memref<8x32xbf16, #tpu.memory_space<vmem>>, %arg4: memref<1x1x8xf32, #tpu.memory_space<vmem>>, %arg5: memref<8x1xf32, #tpu.memory_space<vmem>>, %arg6: memref<8x1xf32, #tpu.memory_space<vmem>>) attributes {dimension_semantics = [#tpu.dimension_semantics<parallel>, #tpu.dimension_semantics<arbitrary>], iteration_bounds = array<i64: 1, 1>, scalar_prefetch = 0 : i64, scratch_operands = 0 : i64, tpu.core_type = #tpu.core_type<tc>, window_params = [{transform_indices = @transform_0, window_bounds = array<i64: 8, 32>}, {transform_indices = @transform_1, window_bounds = array<i64: 8, 32>}, {transform_indices = @transform_2, window_bounds = array<i64: 1, 1, 8>}, {transform_indices = @transform_3, window_bounds = array<i64: 8, 1>}, {transform_indices = @transform_4, window_bounds = array<i64: 8, 1>}]} {
    %c0 = arith.constant 0 : index
    %c0_0 = arith.constant 0 : index
    %0 = vector.load %arg2[%c0, %c0_0] : memref<8x32xbf16, #tpu.memory_space<vmem>>, vector<8x32xbf16>
    %c0_1 = arith.constant 0 : index
    %c0_2 = arith.constant 0 : index
    %1 = vector.load %arg3[%c0_1, %c0_2] : memref<8x32xbf16, #tpu.memory_space<vmem>>, vector<8x32xbf16>
    %2 = arith.extf %0 : vector<8x32xbf16> to vector<8x32xf32>
    %3 = arith.extf %1 : vector<8x32xbf16> to vector<8x32xf32>
    %4 = arith.mulf %2, %2 : vector<8x32xf32>
    %cst = arith.constant dense<0.000000e+00> : vector<8xf32>
    %5 = vector.multi_reduction <add>, %4, %cst [1] : vector<8x32xf32> to vector<8xf32>
    %6 = vector.shape_cast %5 : vector<8xf32> to vector<8x1xf32>
    %cst_3 = arith.constant 1.000000e-16 : f32
    %7 = vector.broadcast %cst_3 : f32 to vector<8x1xf32>
    %8 = arith.maximumf %6, %7 : vector<8x1xf32>
    %9 = math.rsqrt %8 : vector<8x1xf32>
    %10 = arith.mulf %3, %3 : vector<8x32xf32>
    %cst_4 = arith.constant dense<0.000000e+00> : vector<8xf32>
    %11 = vector.multi_reduction <add>, %10, %cst_4 [1] : vector<8x32xf32> to vector<8xf32>
    %12 = vector.shape_cast %11 : vector<8xf32> to vector<8x1xf32>
    %cst_5 = arith.constant 1.000000e-16 : f32
    %13 = vector.broadcast %cst_5 : f32 to vector<8x1xf32>
    %14 = arith.maximumf %12, %13 : vector<8x1xf32>
    %15 = math.rsqrt %14 : vector<8x1xf32>
    %16 = vector.broadcast %15 : vector<8x1xf32> to vector<8x32xf32>
    %17 = arith.mulf %3, %16 : vector<8x32xf32>
    %18 = arith.truncf %17 : vector<8x32xf32> to vector<8x32xbf16>
    %cst_6 = arith.constant dense<0.000000e+00> : vector<8x8xf32>
    %19 = tpu.matmul %0, %18, %cst_6 {dimension_numbers = #tpu.dot_dimension_numbers<[1], [1], [0], [0], [0, 0, 1, 0], [], []>} : vector<8x32xbf16>, vector<8x32xbf16>, vector<8x8xf32> -> vector<8x8xf32>
    %20 = vector.broadcast %9 : vector<8x1xf32> to vector<8x8xf32>
    %21 = arith.mulf %19, %20 : vector<8x8xf32>
    %cst_7 = arith.constant 1.000000e+00 : f32
    %22 = vector.broadcast %cst_7 : f32 to vector<8x8xf32>
    %23 = arith.subf %21, %22 : vector<8x8xf32>
    %24 = math.exp %23 : vector<8x8xf32>
    %cst_8 = arith.constant dense<0.000000e+00> : vector<8xf32>
    %25 = vector.multi_reduction <add>, %24, %cst_8 [0] : vector<8x8xf32> to vector<8xf32>
    %26 = vector.shape_cast %25 : vector<8xf32> to vector<1x8xf32>
    %27 = vector.shape_cast %26 : vector<1x8xf32> to vector<1x1x8xf32>
    %c0_9 = arith.constant 0 : index
    %c0_10 = arith.constant 0 : index
    %c0_11 = arith.constant 0 : index
    %28 = vector.load %arg4[%c0_9, %c0_10, %c0_11] : memref<1x1x8xf32, #tpu.memory_space<vmem>>, vector<1x1x8xf32>
    tpu.vector_store %arg4[%c0_9, %c0_10, %c0_11], %27 {strides = array<i32>} : memref<1x1x8xf32, #tpu.memory_space<vmem>>, vector<1x1x8xf32>,
    %c0_i32 = arith.constant 0 : i32
    %29 = arith.cmpi eq, %arg1, %c0_i32 : i32
    %30 = arith.extui %29 : i1 to i32
    %c0_i32_12 = arith.constant 0 : i32
    %31 = arith.cmpi ne, %30, %c0_i32_12 : i32
    scf.if %31 {
      %cst_19 = arith.constant 0.000000e+00 : f32
      %40 = vector.broadcast %cst_19 : f32 to vector<8x1xf32>
      %c0_20 = arith.constant 0 : index
      %c0_21 = arith.constant 0 : index
      %41 = vector.load %arg5[%c0_20, %c0_21] : memref<8x1xf32, #tpu.memory_space<vmem>>, vector<8x1xf32>
      tpu.vector_store %arg5[%c0_20, %c0_21], %40 {strides = array<i32>} : memref<8x1xf32, #tpu.memory_space<vmem>>, vector<8x1xf32>,
    } else {
    }
    %c0_13 = arith.constant 0 : index
    %c0_14 = arith.constant 0 : index
    %32 = vector.load %arg5[%c0_13, %c0_14] : memref<8x1xf32, #tpu.memory_space<vmem>>, vector<8x1xf32>
    %cst_15 = arith.constant dense<0.000000e+00> : vector<8xf32>
    %33 = vector.multi_reduction <add>, %24, %cst_15 [1] : vector<8x8xf32> to vector<8xf32>
    %34 = vector.shape_cast %33 : vector<8xf32> to vector<8x1xf32>
    %35 = arith.addf %32, %34 : vector<8x1xf32>
    %c0_16 = arith.constant 0 : index
    %c0_17 = arith.constant 0 : index
    %36 = vector.load %arg5[%c0_16, %c0_17] : memref<8x1xf32, #tpu.memory_space<vmem>>, vector<8x1xf32>
    tpu.vector_store %arg5[%c0_16, %c0_17], %35 {strides = array<i32>} : memref<8x1xf32, #tpu.memory_space<vmem>>, vector<8x1xf32>,
    %37 = arith.cmpi eq, %arg0, %arg1 : i32
    %38 = arith.extui %37 : i1 to i32
    %c0_i32_18 = arith.constant 0 : i32
    %39 = arith.cmpi ne, %38, %c0_i32_18 : i32
    scf.if %39 {
      %40 = arith.mulf %2, %17 : vector<8x32xf32>
      %cst_19 = arith.constant dense<0.000000e+00> : vector<8xf32>
      %41 = vector.multi_reduction <add>, %40, %cst_19 [1] : vector<8x32xf32> to vector<8xf32>
      %42 = vector.shape_cast %41 : vector<8xf32> to vector<8x1xf32>
      %43 = arith.mulf %42, %9 : vector<8x1xf32>
      %c0_20 = arith.constant 0 : index
      %c0_21 = arith.constant 0 : index
      %44 = vector.load %arg6[%c0_20, %c0_21] : memref<8x1xf32, #tpu.memory_space<vmem>>, vector<8x1xf32>
      tpu.vector_store %arg6[%c0_20, %c0_21], %43 {strides = array<i32>} : memref<8x1xf32, #tpu.memory_space<vmem>>, vector<8x1xf32>,
    } else {
    }
    return
  }
  func.func @transform_0(%arg0: i32, %arg1: i32) -> (i32, i32) {
    %c0_i32 = arith.constant 0 : i32
    %c0_i32_0 = arith.constant 0 : i32
    return %arg0, %c0_i32 : i32, i32
  }
  func.func @transform_1(%arg0: i32, %arg1: i32) -> (i32, i32) {
    %c0_i32 = arith.constant 0 : i32
    %c0_i32_0 = arith.constant 0 : i32
    return %arg1, %c0_i32 : i32, i32
  }
  func.func @transform_2(%arg0: i32, %arg1: i32) -> (i32, i32, i32) {
    %c0_i32 = arith.constant 0 : i32
    %c0_i32_0 = arith.constant 0 : i32
    return %arg0, %c0_i32, %arg1 : i32, i32, i32
  }
  func.func @transform_3(%arg0: i32, %arg1: i32) -> (i32, i32) {
    %c0_i32 = arith.constant 0 : i32
    %c0_i32_0 = arith.constant 0 : i32
    return %arg0, %c0_i32 : i32, i32
  }
  func.func @transform_4(%arg0: i32, %arg1: i32) -> (i32, i32) {
    %c0_i32 = arith.constant 0 : i32
    %c0_i32_0 = arith.constant 0 : i32
    return %arg0, %c0_i32 : i32, i32
  }
}

</mosaic_0001>

<llo_original>
// kernel: tpu_custom_call.1
$region0: #{tpu_custom_call.1}
  #allocation0 [shape = 'u32[]', space=smem, size = 0x4, offset = 0x4, fixed_abs, tag = 'smem constant byte address 0x4 - core index']
  #allocation1 [shape = 'u32[144,128]{1,0:T(1,128)}', space=vmem, size = 0x12000, scoped, tag = 'internal scratch']
  %s0 = inlined_call_operand.hbm [shape: bf16[8,32], index: 0, kind: input, shape index: {}]
  %s1 = inlined_call_operand.hbm [shape: bf16[8,32], index: 1, kind: input, shape index: {}]
  %s2 = inlined_call_operand.hbm [shape: f32[1,1,8], index: 2, kind: output, shape index: {0}]
  %s3 = inlined_call_operand.vmem [shape: f32[8,1], index: 3, kind: output, shape index: {1}]
  %s4 = inlined_call_operand.vmem [shape: f32[8,1], index: 4, kind: output, shape index: {2}]
  %5 = xla_tuple %s2, %s3, %s4
  %s6 = sld [smem:[#allocation0]]
  $region50: #{tpu_custom_call.1} parent=0
    _
  %s8 = ssub.s32 1, %s6
  %s9 = scalar_select 0, %s8, %s6
  $region1: #{tpu_custom_call.1} parent=0
    #allocation2 [shape = 'u8[2048]{0}', space=vmem, size = 0x800, scoped, tag = 'input window, operand 0, single buffered']
    #allocation3 [shape = 's32[1]{0}', space=sflag, size = 0x4, scoped, tag = 'scoped memory for tpu_custom_call.1']
    #allocation4 [shape = 's32[1]{0}', space=sflag, size = 0x4, scoped, tag = 'scoped memory for tpu_custom_call.1']
    #allocation5 [shape = 'u8[2048]{0}', space=vmem, size = 0x800, scoped, tag = 'input window, operand 1, single buffered']
    #allocation6 [shape = 's32[1]{0}', space=sflag, size = 0x4, scoped, tag = 'scoped memory for tpu_custom_call.1']
    #allocation7 [shape = 'u8[512]{0}', space=vmem, size = 0x400, scoped, tag = 'output window, operand 0, single buffered']
    %10 = vsyncpa [#allocation3], 0
    %11 = vsyncpa [#allocation6], 0
    %12 = vsyncpa [#allocation4], 0
    // Predicated region
    $region2: #{tpu_custom_call.1} parent=1 // pred_check
      _
    $region3: #{tpu_custom_call.1} parent=1 // pred_check_branch
      %14 = sbr.rel (0) target = $region5
    $region4: #{tpu_custom_call.1} parent=1 // pred_region
      %s16 = ssub.s32 64, 64
      %17 = vsyncadd [#allocation3], %s16
      %s19 = sshll.u32 [#allocation2], 4
      %s20 = int_to_ptr.vmem [resolvable:$true] %s19
      %22 = dma.hbm_to_vmem [thread:$0]  %s0, 64, %s20, [#allocation3]
    $region5: #{tpu_custom_call.1} parent=1 // pred_fallthru
      _
    // Predicated region
    $region6: #{tpu_custom_call.1} parent=1 // pred_check
      _
    $region7: #{tpu_custom_call.1} parent=1 // pred_check_branch
      %24 = sbr.rel (0) target = $region9
    $region8: #{tpu_custom_call.1} parent=1 // pred_region
      %s26 = ssub.s32 64, 64
      %27 = vsyncadd [#allocation6], %s26
      %s29 = sshll.u32 [#allocation5], 4
      %s30 = int_to_ptr.vmem [resolvable:$true] %s29
      %32 = dma.hbm_to_vmem [thread:$0]  %s1, 64, %s30, [#allocation6]
    $region9: #{tpu_custom_call.1} parent=1 // pred_fallthru
      _
    // Predicated region
    $region10: #{tpu_custom_call.1} parent=1 // pred_check
      _
    $region11: #{tpu_custom_call.1} parent=1 // pred_check_branch
      %34 = sbr.rel (0) target = $region13
    $region12: #{tpu_custom_call.1} parent=1 // pred_region
      %35 = dma.done [#allocation3], 64
    $region13: #{tpu_custom_call.1} parent=1 // pred_fallthru
      _
    // Predicated region
    $region14: #{tpu_custom_call.1} parent=1 // pred_check
      _
    $region15: #{tpu_custom_call.1} parent=1 // pred_check_branch
      %37 = sbr.rel (0) target = $region17
    $region16: #{tpu_custom_call.1} parent=1 // pred_region
      %38 = dma.done [#allocation6], 64
    $region17: #{tpu_custom_call.1} parent=1 // pred_fallthru
      _
    %v40 = vld [vmem:[#allocation2] sm:$0xf]
    %v41 = vld [vmem:[#allocation5] sm:$0xf]
    %v42 = vunpack.c.l.bf16 %v40
    %v43 = vunpack.c.l.bf16 %v41
    %v44 = vmul.f32 %v42, %v42
    %vm45 = vcmask 261120
    %v46 = vsel %vm45, %v44, 0.0
    %47 = vadd.xlane.f32.xlu0 %v46
    %v48 = vpop.xlane.xlu0 %47
    %v49 = vmax.f32 %v48, 1e-16
    %v50 = vrsqrt.pop %v49
    %v51 = vmul.f32 %v43, %v43
    %v52 = vsel %vm45, %v51, 0.0
    %53 = vadd.xlane.f32.xlu0 %v52
    %v54 = vpop.xlane.xlu0 %53
    %v55 = vmax.f32 %v54, 1e-16
    %v56 = vrsqrt.pop %v55
    %v57 = vmul.f32 %v43, %v56
    %v58 = vpack.c.bf16 %v57, %v57
    %v60 = vsel %vm45, %v40, 0
    %v63 = vsel %vm45, %v58, 0
    %65 = vmatprep.subr.bf16.mxu0 0
    %66 = vmatpush1.bf16.xpose.msra.mxu0 %v63
    %67 = vmatprep.subr.bf16.mxu0 0
    %68 = vmatpush1.bf16.xpose.msra.mxu0 0
    %69 = vmatprep.subr.bf16.mxu0 0
    %70 = vmatpush1.bf16.xpose.msra.mxu0 0
    %71 = vmatprep.subr.bf16.mxu0 0
    %72 = vmatpush1.bf16.xpose.msra.mxu0 0
    %73 = vmatprep.subr.bf16.mxu0 0
    %74 = vmatpush1.bf16.xpose.msra.mxu0 0
    %75 = vmatprep.subr.bf16.mxu0 0
    %76 = vmatpush1.bf16.xpose.msra.mxu0 0
    %77 = vmatprep.subr.bf16.mxu0 0
    %78 = vmatpush1.bf16.xpose.msra.mxu0 0
    %79 = vmatprep.subr.bf16.mxu0 0
    %80 = vmatpush1.bf16.xpose.msra.mxu0 0
    %81 = vmatprep.subr.bf16.mxu0 0
    %82 = vmatpush1.bf16.xpose.msra.mxu0 0
    %83 = vmatprep.subr.bf16.mxu0 0
    %84 = vmatpush1.bf16.xpose.msra.mxu0 0
    %85 = vmatprep.subr.bf16.mxu0 0
    %86 = vmatpush1.bf16.xpose.msra.mxu0 0
    %87 = vmatprep.subr.bf16.mxu0 0
    %88 = vmatpush1.bf16.xpose.msra.mxu0 0
    %89 = vmatprep.subr.bf16.mxu0 0
    %90 = vmatpush1.bf16.xpose.msra.mxu0 0
    %91 = vmatprep.subr.bf16.mxu0 0
    %92 = vmatpush1.bf16.xpose.msra.mxu0 0
    %93 = vmatprep.subr.bf16.mxu0 0
    %94 = vmatpush1.bf16.xpose.msra.mxu0 0
    %95 = vmatprep.subr.bf16.mxu0 0
    %96 = vmatpush1.bf16.xpose.msra.mxu0 0
    %97 = vmatprep.mubr.bf16.mxu0 0
    %98 = vmatmul.mubr.bf16.gmra.mrb[0].mxu0 %v60
    %v99 = vpop.f32.mrb[0].mxu0
    %v100 = vadd.f32 0.0, %v99
    %v101 = vpop.f32.mrb[0].mxu0
    %v102 = vpop.f32.mrb[0].mxu0
    %v103 = vpop.f32.mrb[0].mxu0
    %104 = vdwg.mxu0
    %v105 = vmul.f32 %v100, %v50
    %v106 = vsub.f32 %v105, 1.0
    %v107 = vmul.f32 %v106, 1.442695
    %v108 = vpow.pop %v107
    %vm109 = vcmask 64512
    %v110 = vsel %vm109, %v108, 0.0
    %v111 = vrot.slane %v110, 4
    %v112 = vadd.f32 %v110, %v111
    %v113 = vrot.slane %v112, 2
    %v114 = vadd.f32 %v112, %v113
    %v115 = vrot.slane %v114, 1
    %v116 = vadd.f32 %v114, %v115
    %vm117 = vcmask 57344
    %118 = vst.msk [vmem:[#allocation7] sm:$0x1] %vm117, %v116
    %p119 = scmp.eq.s32.totalorder 0, 0
    // Predicated region
    $region18: #{tpu_custom_call.1} parent=1 // pred_check
      %p120 = pneg %p119
    $region19: #{tpu_custom_call.1} parent=1 // pred_check_branch
      %122 = sbr.rel (%p120) target = $region21
    $region20: #{tpu_custom_call.1} parent=1 // pred_region
      %vm123 = vcmask 7168
      %124 = vst.msk [vmem:[%s3] sm:$0xff] %vm123, 0.0
    $region21: #{tpu_custom_call.1} parent=1 // pred_fallthru
      _
    %v125 = vld [vmem:[%s3] sm:$0xff]
    %126 = vadd.xlane.f32.xlu0 %v110
    %v127 = vpop.xlane.xlu0 %126
    %v128 = vadd.f32 %v125, %v127
    %vm129 = vcmask 7168
    %130 = vst.msk [vmem:[%s3] sm:$0xff] %vm129, %v128
    %p131 = scmp.eq.s32.totalorder 0, 0
    // Predicated region
    $region22: #{tpu_custom_call.1} parent=1 // pred_check
      %p132 = pneg %p131
    $region23: #{tpu_custom_call.1} parent=1 // pred_check_branch
      %134 = sbr.rel (%p132) target = $region25
    $region24: #{tpu_custom_call.1} parent=1 // pred_region
      %v135 = vmul.f32 %v42, %v57
      %v136 = vsel %vm45, %v135, 0.0
      %137 = vadd.xlane.f32.xlu0 %v136
      %v138 = vpop.xlane.xlu0 %137
      %v139 = vmul.f32 %v138, %v50
      %140 = vst.msk [vmem:[%s4] sm:$0xff] %vm129, %v139
    $region25: #{tpu_custom_call.1} parent=1 // pred_fallthru
      _
    // Predicated region
    $region26: #{tpu_custom_call.1} parent=1 // pred_check
      _
    $region27: #{tpu_custom_call.1} parent=1 // pred_check_branch
      %142 = sbr.rel (0) target = $region29
    $region28: #{tpu_custom_call.1} parent=1 // pred_region
      %s144 = ssub.s32 16, 16
      %145 = vsyncadd [#allocation4], %s144
      %s147 = sshll.u32 [#allocation7], 4
      %s148 = int_to_ptr.vmem [resolvable:$true] %s147
      %150 = dma.vmem_to_hbm [thread:$0]  %s148, 16, %s2, [#allocation4]
    $region29: #{tpu_custom_call.1} parent=1 // pred_fallthru
      _
    // Predicated region
    $region30: #{tpu_custom_call.1} parent=1 // pred_check
      _
    $region31: #{tpu_custom_call.1} parent=1 // pred_check_branch
      %152 = sbr.rel (0) target = $region33
    $region32: #{tpu_custom_call.1} parent=1 // pred_region
      _
    $region33: #{tpu_custom_call.1} parent=1 // pred_fallthru
      _
    // Predicated region
    $region34: #{tpu_custom_call.1} parent=1 // pred_check
      _
    $region35: #{tpu_custom_call.1} parent=1 // pred_check_branch
      %154 = sbr.rel (0) target = $region37
    $region36: #{tpu_custom_call.1} parent=1 // pred_region
      _
    $region37: #{tpu_custom_call.1} parent=1 // pred_fallthru
      _
    // Predicated region
    $region38: #{tpu_custom_call.1} parent=1 // pred_check
      _
    $region39: #{tpu_custom_call.1} parent=1 // pred_check_branch
      %156 = sbr.rel (0) target = $region41
    $region40: #{tpu_custom_call.1} parent=1 // pred_region
      %157 = dma.done [#allocation4], 16
    $region41: #{tpu_custom_call.1} parent=1 // pred_fallthru
      _
    // Predicated region
    $region42: #{tpu_custom_call.1} parent=1 // pred_check
      _
    $region43: #{tpu_custom_call.1} parent=1 // pred_check_branch
      %159 = sbr.rel (0) target = $region45
    $region44: #{tpu_custom_call.1} parent=1 // pred_region
      _
    $region45: #{tpu_custom_call.1} parent=1 // pred_fallthru
      _
    // Predicated region
    $region46: #{tpu_custom_call.1} parent=1 // pred_check
      _
    $region47: #{tpu_custom_call.1} parent=1 // pred_check_branch
      %161 = sbr.rel (0) target = $region49
    $region48: #{tpu_custom_call.1} parent=1 // pred_region
      _
    $region49: #{tpu_custom_call.1} parent=1 // pred_fallthru
      _
    %162 = vsyncpa [#allocation3], 1
    %163 = vsyncpa [#allocation6], 1
    %164 = vsyncpa [#allocation4], 1

</llo_original>
